<compile_context>
chip_gen: v7x
topology: tpu7x:2x2x1
jax: 0.10.0
libtpu: 0.0.40
codegen_flags: <defaults>
</compile_context>

<pallas_src>
import jax
import jax.numpy as jnp
from jax.experimental import pallas as pl
from jax.experimental.pallas import tpu as pltpu


def _round_up(a, b):
    return (a + b - 1) // b * b


def _normal_encoder_kernel(x_ref, w1_ref, b1_ref, w2_ref, b2_ref,
                           wmu_ref, bmu_ref, wlv_ref, blv_ref,
                           mu_ref, std_ref):
    # Hidden layers: bf16 operands on the MXU, f32 accumulation, f32 bias/ReLU.
    h1 = jnp.dot(x_ref[...], w1_ref[...],
                 preferred_element_type=jnp.float32) + b1_ref[...]
    h1 = jnp.maximum(h1, 0.0).astype(jnp.bfloat16)
    h2 = jnp.dot(h1, w2_ref[...],
                 preferred_element_type=jnp.float32) + b2_ref[...]
    h2 = jnp.maximum(h2, 0.0).astype(jnp.bfloat16)
    # Final layer split into mu / logvar halves (== torch.chunk(out, 2, -1)).
    mu = jnp.dot(h2, wmu_ref[...],
                 preferred_element_type=jnp.float32) + bmu_ref[...]
    lv = jnp.dot(h2, wlv_ref[...],
                 preferred_element_type=jnp.float32) + blv_ref[...]
    # std = clamp(exp(0.5 * logvar), 1e-8, 1e8); exp runs on the EUP slot.
    std = jnp.clip(jnp.exp(0.5 * lv), 1e-8, 1e8)
    mu_ref[...] = mu.astype(mu_ref.dtype)
    std_ref[...] = std.astype(std_ref.dtype)


def normal_encoder_forward(x, params, d_z, *, max_rows_per_tile=512):
    """Fused NormalEncoder forward.

    x: (N, D) float32.  Returns (mu, std), each (N, d_z) float32 — the
    parameters of Independent(Normal(mu, std), 1).
    """
    w1, b1, w2, b2, w3, b3 = params
    n, d = x.shape
    h = w1.shape[1]
    assert w3.shape[1] == 2 * d_z

    # Split the last linear layer into mu / logvar halves and zero-pad the
    # latent (lane) dimension to a multiple of 128 -> lane-dense output stores.
    dz_pad = _round_up(d_z, 128)
    pc = dz_pad - d_z
    w_mu = jnp.pad(w3[:, :d_z], ((0, 0), (0, pc)))
    w_lv = jnp.pad(w3[:, d_z:], ((0, 0), (0, pc)))
    b_mu = jnp.pad(b3[:, :d_z], ((0, 0), (0, pc)))
    b_lv = jnp.pad(b3[:, d_z:], ((0, 0), (0, pc)))

    # bf16 matmul operands (accumulation stays f32 in-kernel); biases f32.
    bf = lambda a: a.astype(jnp.bfloat16)
    xw = bf(x)
    w1b, w2b, wmub, wlvb = bf(w1), bf(w2), bf(w_mu), bf(w_lv)

    # Tile over the batch dimension; pad N up to a full number of tiles.
    tm = min(max_rows_per_tile, _round_up(n, 8))
    n_pad = _round_up(n, tm)
    if n_pad != n:
        xw = jnp.pad(xw, ((0, n_pad - n), (0, 0)))
    grid = (n_pad // tm,)

    row_spec = lambda shape: pl.BlockSpec(shape, lambda i: (i, 0))   # tiled over N
    res_spec = lambda shape: pl.BlockSpec(shape, lambda i: (0, 0))   # VMEM-resident

    flops = 2 * n_pad * (d * h + h * h + 2 * h * dz_pad)
    bytes_accessed = (n_pad * d * 2                                  # x (bf16)
                      + (d * h + h * h + 2 * h * dz_pad) * 2         # weights (bf16)
                      + (2 * h + 2 * dz_pad) * 4                     # biases (f32)
                      + 2 * n_pad * dz_pad * 4)                      # mu, std (f32)

    mu, std = pl.pallas_call(
        _normal_encoder_kernel,
        out_shape=(jax.ShapeDtypeStruct((n_pad, dz_pad), jnp.float32),
                   jax.ShapeDtypeStruct((n_pad, dz_pad), jnp.float32)),
        grid=grid,
        in_specs=[
            row_spec((tm, d)),
            res_spec(w1b.shape), res_spec(b1.shape),
            res_spec(w2b.shape), res_spec(b2.shape),
            res_spec(wmub.shape), res_spec(b_mu.shape),
            res_spec(wlvb.shape), res_spec(b_lv.shape),
        ],
        out_specs=(row_spec((tm, dz_pad)), row_spec((tm, dz_pad))),
        compiler_params=pltpu.CompilerParams(
            dimension_semantics=("parallel",)),
        cost_estimate=pl.CostEstimate(
            flops=flops,
            transcendentals=n_pad * dz_pad,
            bytes_accessed=bytes_accessed),
    )(xw, w1b, b1, w2b, b2, wmub, b_mu, wlvb, b_lv)

    return mu[:n, :d_z], std[:n, :d_z]


def independent_normal_log_prob(mu, std, z):
    """log_prob of td.Independent(td.Normal(mu, std), 1) at z (plain JAX glue)."""
    lp = -0.5 * (((z - mu) / std) ** 2 + 2.0 * jnp.log(std)
                 + jnp.log(2.0 * jnp.pi))
    return jnp.sum(lp, axis=-1)


def init_params(key, d_in, hidden, d_z):
    """Deterministic init of the canonical MLP encoder_net (output dim 2*d_z)."""
    k1, k2, k3 = jax.random.split(key, 3)
    w1 = jax.random.normal(k1, (d_in, hidden), jnp.float32) * (2.0 / d_in) ** 0.5
    b1 = jnp.zeros((1, hidden), jnp.float32)
    w2 = jax.random.normal(k2, (hidden, hidden), jnp.float32) * (2.0 / hidden) ** 0.5
    b2 = jnp.zeros((1, hidden), jnp.float32)
    w3 = jax.random.normal(k3, (hidden, 2 * d_z), jnp.float32) * (1.0 / hidden) ** 0.5
    b3 = jnp.zeros((1, 2 * d_z), jnp.float32)
    return (w1, b1, w2, b2, w3, b3)


if __name__ == "__main__":
    # Small shapes consistent with a latent-space encoder:
    # batch=8, features=32, hidden=128 (MXU-friendly), latent dim d_z=16.
    N, D, H, DZ = 8, 32, 128, 16

    key = jax.random.PRNGKey(0)
    kx, kp, kz = jax.random.split(key, 3)

    x = jax.random.normal(kx, (N, D), jnp.float32)
    params = init_params(kp, D, H, DZ)

    mu, std = jax.block_until_ready(normal_encoder_forward(x, params, DZ))

    # Pure-JAX reference with the same bf16-operand / f32-accumulate recipe.
    w1, b1, w2, b2, w3, b3 = params
    bf = lambda a: a.astype(jnp.bfloat16)
    h1 = jnp.maximum(jnp.dot(bf(x), bf(w1),
                             preferred_element_type=jnp.float32) + b1, 0.0)
    h2 = jnp.maximum(jnp.dot(bf(h1), bf(w2),
                             preferred_element_type=jnp.float32) + b2, 0.0)
    out = jnp.dot(bf(h2), bf(w3), preferred_element_type=jnp.float32) + b3
    mu_r, lv_r = jnp.split(out, 2, axis=-1)
    std_r = jnp.clip(jnp.exp(0.5 * lv_r), 1e-8, 1e8)

    assert mu.shape == (N, DZ) and std.shape == (N, DZ)
    assert jnp.allclose(mu, mu_r, atol=2e-2, rtol=2e-2)
    assert jnp.allclose(std, std_r, atol=2e-2, rtol=2e-2)
    assert bool(jnp.all(std > 0))

    # Exercise the distribution semantics (rsample + log_prob of Independent).
    # TODO(synk): the torch.distributions.Independent/Normal *object* has no
    # Pallas equivalent; the kernel returns its parameters (mu, std).
    z = mu + std * jax.random.normal(kz, mu.shape, jnp.float32)
    _ = jax.block_until_ready(independent_normal_log_prob(mu, std, z))

    print("KERNEL_OK")
</pallas_src>

<mosaic_0001>
module attributes {stable_mosaic.version = 11 : i64} {
  func.func @_normal_encoder_kernel(%arg0: i32, %arg1: memref<8x32xbf16, #tpu.memory_space<vmem>>, %arg2: memref<32x128xbf16, #tpu.memory_space<vmem>>, %arg3: memref<1x128xf32, #tpu.memory_space<vmem>>, %arg4: memref<128x128xbf16, #tpu.memory_space<vmem>>, %arg5: memref<1x128xf32, #tpu.memory_space<vmem>>, %arg6: memref<128x128xbf16, #tpu.memory_space<vmem>>, %arg7: memref<1x128xf32, #tpu.memory_space<vmem>>, %arg8: memref<128x128xbf16, #tpu.memory_space<vmem>>, %arg9: memref<1x128xf32, #tpu.memory_space<vmem>>, %arg10: memref<8x128xf32, #tpu.memory_space<vmem>>, %arg11: memref<8x128xf32, #tpu.memory_space<vmem>>) attributes {dimension_semantics = [#tpu.dimension_semantics<parallel>], iteration_bounds = array<i64: 1>, scalar_prefetch = 0 : i64, scratch_operands = 0 : i64, tpu.core_type = #tpu.core_type<tc>, window_params = [{transform_indices = @transform_0, window_bounds = array<i64: 8, 32>}, {pipeline_mode = #tpu.pipeline_mode<synchronous>, transform_indices = @transform_1, window_bounds = array<i64: 32, 128>}, {pipeline_mode = #tpu.pipeline_mode<synchronous>, transform_indices = @transform_2, window_bounds = array<i64: 1, 128>}, {pipeline_mode = #tpu.pipeline_mode<synchronous>, transform_indices = @transform_3, window_bounds = array<i64: 128, 128>}, {pipeline_mode = #tpu.pipeline_mode<synchronous>, transform_indices = @transform_4, window_bounds = array<i64: 1, 128>}, {pipeline_mode = #tpu.pipeline_mode<synchronous>, transform_indices = @transform_5, window_bounds = array<i64: 128, 128>}, {pipeline_mode = #tpu.pipeline_mode<synchronous>, transform_indices = @transform_6, window_bounds = array<i64: 1, 128>}, {pipeline_mode = #tpu.pipeline_mode<synchronous>, transform_indices = @transform_7, window_bounds = array<i64: 128, 128>}, {pipeline_mode = #tpu.pipeline_mode<synchronous>, transform_indices = @transform_8, window_bounds = array<i64: 1, 128>}, {transform_indices = @transform_9, window_bounds = array<i64: 8, 128>}, {transform_indices = @transform_10, window_bounds = array<i64: 8, 128>}]} {
    %c0 = arith.constant 0 : index
    %c0_0 = arith.constant 0 : index
    %0 = vector.load %arg1[%c0, %c0_0] : memref<8x32xbf16, #tpu.memory_space<vmem>>, vector<8x32xbf16>
    %c0_1 = arith.constant 0 : index
    %c0_2 = arith.constant 0 : index
    %1 = vector.load %arg2[%c0_1, %c0_2] : memref<32x128xbf16, #tpu.memory_space<vmem>>, vector<32x128xbf16>
    %cst = arith.constant dense<0.000000e+00> : vector<8x128xf32>
    %2 = tpu.matmul %0, %1, %cst {dimension_numbers = #tpu.dot_dimension_numbers<[1], [0], [0], [1], [0, 0, 1, 1], [], []>} : vector<8x32xbf16>, vector<32x128xbf16>, vector<8x128xf32> -> vector<8x128xf32>
    %c0_3 = arith.constant 0 : index
    %c0_4 = arith.constant 0 : index
    %3 = vector.load %arg3[%c0_3, %c0_4] : memref<1x128xf32, #tpu.memory_space<vmem>>, vector<1x128xf32>
    %4 = vector.broadcast %3 : vector<1x128xf32> to vector<8x128xf32>
    %5 = arith.addf %2, %4 : vector<8x128xf32>
    %cst_5 = arith.constant 0.000000e+00 : f32
    %6 = vector.broadcast %cst_5 : f32 to vector<8x128xf32>
    %7 = arith.maximumf %5, %6 : vector<8x128xf32>
    %8 = arith.truncf %7 : vector<8x128xf32> to vector<8x128xbf16>
    %c0_6 = arith.constant 0 : index
    %c0_7 = arith.constant 0 : index
    %9 = vector.load %arg4[%c0_6, %c0_7] : memref<128x128xbf16, #tpu.memory_space<vmem>>, vector<128x128xbf16>
    %cst_8 = arith.constant dense<0.000000e+00> : vector<8x128xf32>
    %10 = tpu.matmul %8, %9, %cst_8 {dimension_numbers = #tpu.dot_dimension_numbers<[1], [0], [0], [1], [0, 0, 1, 1], [], []>} : vector<8x128xbf16>, vector<128x128xbf16>, vector<8x128xf32> -> vector<8x128xf32>
    %c0_9 = arith.constant 0 : index
    %c0_10 = arith.constant 0 : index
    %11 = vector.load %arg5[%c0_9, %c0_10] : memref<1x128xf32, #tpu.memory_space<vmem>>, vector<1x128xf32>
    %12 = vector.broadcast %11 : vector<1x128xf32> to vector<8x128xf32>
    %13 = arith.addf %10, %12 : vector<8x128xf32>
    %cst_11 = arith.constant 0.000000e+00 : f32
    %14 = vector.broadcast %cst_11 : f32 to vector<8x128xf32>
    %15 = arith.maximumf %13, %14 : vector<8x128xf32>
    %16 = arith.truncf %15 : vector<8x128xf32> to vector<8x128xbf16>
    %c0_12 = arith.constant 0 : index
    %c0_13 = arith.constant 0 : index
    %17 = vector.load %arg6[%c0_12, %c0_13] : memref<128x128xbf16, #tpu.memory_space<vmem>>, vector<128x128xbf16>
    %cst_14 = arith.constant dense<0.000000e+00> : vector<8x128xf32>
    %18 = tpu.matmul %16, %17, %cst_14 {dimension_numbers = #tpu.dot_dimension_numbers<[1], [0], [0], [1], [0, 0, 1, 1], [], []>} : vector<8x128xbf16>, vector<128x128xbf16>, vector<8x128xf32> -> vector<8x128xf32>
    %c0_15 = arith.constant 0 : index
    %c0_16 = arith.constant 0 : index
    %19 = vector.load %arg7[%c0_15, %c0_16] : memref<1x128xf32, #tpu.memory_space<vmem>>, vector<1x128xf32>
    %20 = vector.broadcast %19 : vector<1x128xf32> to vector<8x128xf32>
    %21 = arith.addf %18, %20 : vector<8x128xf32>
    %c0_17 = arith.constant 0 : index
    %c0_18 = arith.constant 0 : index
    %22 = vector.load %arg8[%c0_17, %c0_18] : memref<128x128xbf16, #tpu.memory_space<vmem>>, vector<128x128xbf16>
    %cst_19 = arith.constant dense<0.000000e+00> : vector<8x128xf32>
    %23 = tpu.matmul %16, %22, %cst_19 {dimension_numbers = #tpu.dot_dimension_numbers<[1], [0], [0], [1], [0, 0, 1, 1], [], []>} : vector<8x128xbf16>, vector<128x128xbf16>, vector<8x128xf32> -> vector<8x128xf32>
    %c0_20 = arith.constant 0 : index
    %c0_21 = arith.constant 0 : index
    %24 = vector.load %arg9[%c0_20, %c0_21] : memref<1x128xf32, #tpu.memory_space<vmem>>, vector<1x128xf32>
    %25 = vector.broadcast %24 : vector<1x128xf32> to vector<8x128xf32>
    %26 = arith.addf %23, %25 : vector<8x128xf32>
    %cst_22 = arith.constant 5.000000e-01 : f32
    %27 = vector.broadcast %cst_22 : f32 to vector<8x128xf32>
    %28 = arith.mulf %27, %26 : vector<8x128xf32>
    %29 = math.exp %28 : vector<8x128xf32>
    %cst_23 = arith.constant 9.99999993E-9 : f32
    %cst_24 = arith.constant 1.000000e+08 : f32
    %30 = vector.broadcast %cst_23 : f32 to vector<8x128xf32>
    %31 = arith.maximumf %30, %29 : vector<8x128xf32>
    %32 = vector.broadcast %cst_24 : f32 to vector<8x128xf32>
    %33 = arith.minimumf %32, %31 : vector<8x128xf32>
    %c0_25 = arith.constant 0 : index
    %c0_26 = arith.constant 0 : index
    %34 = vector.load %arg10[%c0_25, %c0_26] : memref<8x128xf32, #tpu.memory_space<vmem>>, vector<8x128xf32>
    tpu.vector_store %arg10[%c0_25, %c0_26], %21 {strides = array<i32>} : memref<8x128xf32, #tpu.memory_space<vmem>>, vector<8x128xf32>,
    %c0_27 = arith.constant 0 : index
    %c0_28 = arith.constant 0 : index
    %35 = vector.load %arg11[%c0_27, %c0_28] : memref<8x128xf32, #tpu.memory_space<vmem>>, vector<8x128xf32>
    tpu.vector_store %arg11[%c0_27, %c0_28], %33 {strides = array<i32>} : memref<8x128xf32, #tpu.memory_space<vmem>>, vector<8x128xf32>,
    return
  }
  func.func @transform_0(%arg0: i32) -> (i32, i32) {
    %c0_i32 = arith.constant 0 : i32
    %c0_i32_0 = arith.constant 0 : i32
    return %arg0, %c0_i32 : i32, i32
  }
  func.func @transform_1(%arg0: i32) -> (i32, i32) {
    %c0_i32 = arith.constant 0 : i32
    %c0_i32_0 = arith.constant 0 : i32
    %c0_i32_1 = arith.constant 0 : i32
    return %c0_i32, %c0_i32_0 : i32, i32
  }
  func.func @transform_2(%arg0: i32) -> (i32, i32) {
    %c0_i32 = arith.constant 0 : i32
    %c0_i32_0 = arith.constant 0 : i32
    %c0_i32_1 = arith.constant 0 : i32
    return %c0_i32, %c0_i32_0 : i32, i32
  }
  func.func @transform_3(%arg0: i32) -> (i32, i32) {
    %c0_i32 = arith.constant 0 : i32
    %c0_i32_0 = arith.constant 0 : i32
    %c0_i32_1 = arith.constant 0 : i32
    return %c0_i32, %c0_i32_0 : i32, i32
  }
  func.func @transform_4(%arg0: i32) -> (i32, i32) {
    %c0_i32 = arith.constant 0 : i32
    %c0_i32_0 = arith.constant 0 : i32
    %c0_i32_1 = arith.constant 0 : i32
    return %c0_i32, %c0_i32_0 : i32, i32
  }
  func.func @transform_5(%arg0: i32) -> (i32, i32) {
    %c0_i32 = arith.constant 0 : i32
    %c0_i32_0 = arith.constant 0 : i32
    %c0_i32_1 = arith.constant 0 : i32
    return %c0_i32, %c0_i32_0 : i32, i32
  }
  func.func @transform_6(%arg0: i32) -> (i32, i32) {
    %c0_i32 = arith.constant 0 : i32
    %c0_i32_0 = arith.constant 0 : i32
    %c0_i32_1 = arith.constant 0 : i32
    return %c0_i32, %c0_i32_0 : i32, i32
  }
  func.func @transform_7(%arg0: i32) -> (i32, i32) {
    %c0_i32 = arith.constant 0 : i32
    %c0_i32_0 = arith.constant 0 : i32
    %c0_i32_1 = arith.constant 0 : i32
    return %c0_i32, %c0_i32_0 : i32, i32
  }
  func.func @transform_8(%arg0: i32) -> (i32, i32) {
    %c0_i32 = arith.constant 0 : i32
    %c0_i32_0 = arith.constant 0 : i32
    %c0_i32_1 = arith.constant 0 : i32
    return %c0_i32, %c0_i32_0 : i32, i32
  }
  func.func @transform_9(%arg0: i32) -> (i32, i32) {
    %c0_i32 = arith.constant 0 : i32
    %c0_i32_0 = arith.constant 0 : i32
    return %arg0, %c0_i32 : i32, i32
  }
  func.func @transform_10(%arg0: i32) -> (i32, i32) {
    %c0_i32 = arith.constant 0 : i32
    %c0_i32_0 = arith.constant 0 : i32
    return %arg0, %c0_i32 : i32, i32
  }
}

</mosaic_0001>

<llo_original>
// kernel: tpu_custom_call.1
$region0: #{tpu_custom_call.1}
  #allocation0 [shape = 'u32[]', space=smem, size = 0x4, offset = 0x4, fixed_abs, tag = 'smem constant byte address 0x4 - core index']
  #allocation1 [shape = 'u32[144,128]{1,0:T(1,128)}', space=vmem, size = 0x12000, scoped, tag = 'internal scratch']
  %s0 = inlined_call_operand.hbm [shape: bf16[8,32], index: 0, kind: input, shape index: {}]
  %s1 = inlined_call_operand.hbm [shape: bf16[32,128], index: 1, kind: input, shape index: {}]
  %s2 = inlined_call_operand.vmem [shape: f32[1,128], index: 2, kind: input, shape index: {}]
  %s3 = inlined_call_operand.hbm [shape: bf16[128,128], index: 3, kind: input, shape index: {}]
  %s4 = inlined_call_operand.vmem [shape: f32[1,128], index: 4, kind: input, shape index: {}]
  %s5 = inlined_call_operand.hbm [shape: bf16[128,128], index: 5, kind: input, shape index: {}]
  %s6 = inlined_call_operand.vmem [shape: f32[1,128], index: 6, kind: input, shape index: {}]
  %s7 = inlined_call_operand.hbm [shape: bf16[128,128], index: 7, kind: input, shape index: {}]
  %s8 = inlined_call_operand.vmem [shape: f32[1,128], index: 8, kind: input, shape index: {}]
  %s9 = inlined_call_operand.hbm [shape: f32[8,128], index: 9, kind: output, shape index: {0}]
  %s10 = inlined_call_operand.hbm [shape: f32[8,128], index: 10, kind: output, shape index: {1}]
  %11 = xla_tuple %s9, %s10
  %s12 = sld [smem:[#allocation0]]
  $region74: #{tpu_custom_call.1} parent=0
    _
  %s14 = ssub.s32 1, %s12
  %s15 = scalar_select 0, %s14, %s12
  $region1: #{tpu_custom_call.1} parent=0
    #allocation2 [shape = 'u8[2048]{0}', space=vmem, size = 0x800, scoped, tag = 'input window, operand 0, single buffered']
    #allocation3 [shape = 's32[1]{0}', space=sflag, size = 0x4, scoped, tag = 'scoped memory for tpu_custom_call.1']
    #allocation4 [shape = 's32[1]{0}', space=sflag, size = 0x4, scoped, tag = 'scoped memory for tpu_custom_call.1']
    #allocation5 [shape = 'u8[8192]{0}', space=vmem, size = 0x2000, scoped, tag = 'input window, operand 1, single buffered']
    #allocation6 [shape = 's32[1]{0}', space=sflag, size = 0x4, scoped, tag = 'scoped memory for tpu_custom_call.1']
    #allocation7 [shape = 'u8[32768]{0}', space=vmem, size = 0x8000, scoped, tag = 'input window, operand 3, single buffered']
    #allocation8 [shape = 'u8[32768]{0}', space=vmem, size = 0x8000, scoped, tag = 'input window, operand 5, single buffered']
    #allocation9 [shape = 's32[1]{0}', space=sflag, size = 0x4, scoped, tag = 'scoped memory for tpu_custom_call.1']
    #allocation10 [shape = 'u8[32768]{0}', space=vmem, size = 0x8000, scoped, tag = 'input window, operand 7, single buffered']
    #allocation11 [shape = 'u8[4096]{0}', space=vmem, size = 0x1000, scoped, tag = 'output window, operand 0, single buffered']
    #allocation12 [shape = 'u8[4096]{0}', space=vmem, size = 0x1000, scoped, tag = 'output window, operand 1, single buffered']
    #allocation13 [shape = 's32[1]{0}', space=sflag, size = 0x4, scoped, tag = 'scoped memory for tpu_custom_call.1']
    %16 = vsyncpa [#allocation3], 0
    %17 = vsyncpa [#allocation6], 0
    %18 = vsyncpa [#allocation9], 0
    %19 = vsyncpa [#allocation4], 0
    %20 = vsyncpa [#allocation13], 0
    // Predicated region
    $region2: #{tpu_custom_call.1} parent=1 // pred_check
      _
    $region3: #{tpu_custom_call.1} parent=1 // pred_check_branch
      %22 = sbr.rel (0) target = $region5
    $region4: #{tpu_custom_call.1} parent=1 // pred_region
      %s24 = ssub.s32 64, 64
      %25 = vsyncadd [#allocation3], %s24
      %s27 = sshll.u32 [#allocation2], 4
      %s28 = int_to_ptr.vmem [resolvable:$true] %s27
      %30 = dma.hbm_to_vmem [thread:$0]  %s0, 64, %s28, [#allocation3]
    $region5: #{tpu_custom_call.1} parent=1 // pred_fallthru
      _
    // Predicated region
    $region6: #{tpu_custom_call.1} parent=1 // pred_check
      _
    $region7: #{tpu_custom_call.1} parent=1 // pred_check_branch
      %32 = sbr.rel (0) target = $region9
    $region8: #{tpu_custom_call.1} parent=1 // pred_region
      %s34 = ssub.s32 256, 256
      %35 = vsyncadd [#allocation6], %s34
      %s36 = sshll.u32 [#allocation5], 4
      %s37 = int_to_ptr.vmem [resolvable:$true] %s36
      %42 = dma.hbm_to_vmem [thread:$0]  %s1, 256, %s37, [#allocation6], 64, 64, 4
    $region9: #{tpu_custom_call.1} parent=1 // pred_fallthru
      _
    // Predicated region
    $region10: #{tpu_custom_call.1} parent=1 // pred_check
      _
    $region11: #{tpu_custom_call.1} parent=1 // pred_check_branch
      %44 = sbr.rel (0) target = $region13
    $region12: #{tpu_custom_call.1} parent=1 // pred_region
      _
    $region13: #{tpu_custom_call.1} parent=1 // pred_fallthru
      _
    // Predicated region
    $region14: #{tpu_custom_call.1} parent=1 // pred_check
      _
    $region15: #{tpu_custom_call.1} parent=1 // pred_check_branch
      %46 = sbr.rel (0) target = $region17
    $region16: #{tpu_custom_call.1} parent=1 // pred_region
      %s48 = ssub.s32 1024, 1024
      %49 = vsyncadd [#allocation6], %s48
      %s50 = sshll.u32 [#allocation7], 4
      %s51 = int_to_ptr.vmem [resolvable:$true] %s50
      %56 = dma.hbm_to_vmem [thread:$0]  %s3, 1024, %s51, [#allocation6], 64, 64, 4
    $region17: #{tpu_custom_call.1} parent=1 // pred_fallthru
      _
    // Predicated region
    $region18: #{tpu_custom_call.1} parent=1 // pred_check
      _
    $region19: #{tpu_custom_call.1} parent=1 // pred_check_branch
      %58 = sbr.rel (0) target = $region21
    $region20: #{tpu_custom_call.1} parent=1 // pred_region
      _
    $region21: #{tpu_custom_call.1} parent=1 // pred_fallthru
      _
    // Predicated region
    $region22: #{tpu_custom_call.1} parent=1 // pred_check
      _
    $region23: #{tpu_custom_call.1} parent=1 // pred_check_branch
      %60 = sbr.rel (0) target = $region25
    $region24: #{tpu_custom_call.1} parent=1 // pred_region
      %s62 = ssub.s32 1024, 1024
      %63 = vsyncadd [#allocation9], %s62
      %s64 = sshll.u32 [#allocation8], 4
      %s65 = int_to_ptr.vmem [resolvable:$true] %s64
      %70 = dma.hbm_to_vmem [thread:$0]  %s5, 1024, %s65, [#allocation9], 64, 64, 4
    $region25: #{tpu_custom_call.1} parent=1 // pred_fallthru
      _
    // Predicated region
    $region26: #{tpu_custom_call.1} parent=1 // pred_check
      _
    $region27: #{tpu_custom_call.1} parent=1 // pred_check_branch
      %72 = sbr.rel (0) target = $region29
    $region28: #{tpu_custom_call.1} parent=1 // pred_region
      _
    $region29: #{tpu_custom_call.1} parent=1 // pred_fallthru
      _
    // Predicated region
    $region30: #{tpu_custom_call.1} parent=1 // pred_check
      _
    $region31: #{tpu_custom_call.1} parent=1 // pred_check_branch
      %74 = sbr.rel (0) target = $region33
    $region32: #{tpu_custom_call.1} parent=1 // pred_region
      %s76 = ssub.s32 1024, 1024
      %77 = vsyncadd [#allocation9], %s76
      %s78 = sshll.u32 [#allocation10], 4
      %s79 = int_to_ptr.vmem [resolvable:$true] %s78
      %84 = dma.hbm_to_vmem [thread:$0]  %s7, 1024, %s79, [#allocation9], 64, 64, 4
    $region33: #{tpu_custom_call.1} parent=1 // pred_fallthru
      _
    // Predicated region
    $region34: #{tpu_custom_call.1} parent=1 // pred_check
      _
    $region35: #{tpu_custom_call.1} parent=1 // pred_check_branch
      %86 = sbr.rel (0) target = $region37
    $region36: #{tpu_custom_call.1} parent=1 // pred_region
      _
    $region37: #{tpu_custom_call.1} parent=1 // pred_fallthru
      _
    // Predicated region
    $region38: #{tpu_custom_call.1} parent=1 // pred_check
      _
    $region39: #{tpu_custom_call.1} parent=1 // pred_check_branch
      %88 = sbr.rel (0) target = $region41
    $region40: #{tpu_custom_call.1} parent=1 // pred_region
      %89 = dma.done [#allocation3], 64
    $region41: #{tpu_custom_call.1} parent=1 // pred_fallthru
      _
    // Predicated region
    $region42: #{tpu_custom_call.1} parent=1 // pred_check
      _
    $region43: #{tpu_custom_call.1} parent=1 // pred_check_branch
      %91 = sbr.rel (0) target = $region45
    $region44: #{tpu_custom_call.1} parent=1 // pred_region
      %92 = dma.done [#allocation6], 256
    $region45: #{tpu_custom_call.1} parent=1 // pred_fallthru
      _
    // Predicated region
    $region46: #{tpu_custom_call.1} parent=1 // pred_check
      _
    $region47: #{tpu_custom_call.1} parent=1 // pred_check_branch
      %94 = sbr.rel (0) target = $region49
    $region48: #{tpu_custom_call.1} parent=1 // pred_region
      %95 = dma.done [#allocation6], 1024
    $region49: #{tpu_custom_call.1} parent=1 // pred_fallthru
      _
    // Predicated region
    $region50: #{tpu_custom_call.1} parent=1 // pred_check
      _
    $region51: #{tpu_custom_call.1} parent=1 // pred_check_branch
      %97 = sbr.rel (0) target = $region53
    $region52: #{tpu_custom_call.1} parent=1 // pred_region
      %98 = dma.done [#allocation9], 1024
    $region53: #{tpu_custom_call.1} parent=1 // pred_fallthru
      _
    // Predicated region
    $region54: #{tpu_custom_call.1} parent=1 // pred_check
      _
    $region55: #{tpu_custom_call.1} parent=1 // pred_check_branch
      %100 = sbr.rel (0) target = $region57
    $region56: #{tpu_custom_call.1} parent=1 // pred_region
      %101 = dma.done [#allocation9], 1024
    $region57: #{tpu_custom_call.1} parent=1 // pred_fallthru
      _
    %v103 = vld [vmem:[#allocation2] sm:$0xf]
    %v104 = vld [vmem:[#allocation5] sm:$0xf]
    %v105 = vld [vmem:[#allocation5 + $0x4] sm:$0xf]
    %v106 = vld [vmem:[#allocation5 + $0x8] sm:$0xf]
    %v107 = vld [vmem:[#allocation5 + $0xc] sm:$0xf]
    %v108 = vld [vmem:[%s2] sm:$0x1]
    %v110 = vlaneseq
    %v111 = vshrl.u32 %v110, 7
    %v112 = vsub.s32 0, %v111
    %v113 = vrot.slane %v108, %v112
    %v119 = vunpack.c.l.b16 %v104
    %v120 = vunpack.c.l.b16 %v105
    %v121 = vunpack.c.l.b16 %v106
    %v122 = vunpack.c.l.b16 %v107
    %v123 = vpack.c.b16 %v120, %v119
    %v124 = vpack.c.b16 %v122, %v121
    %vm127 = vcmask 261120
    %v129 = vsel %vm127, %v103, 0
    %131 = vmatprep.subr.bf16.mxu0 0
    %132 = vmatpush1.bf16.msra.mxu0 %v123
    %133 = vmatprep.subr.bf16.mxu0 0
    %134 = vmatpush1.bf16.msra.mxu0 %v124
    %135 = vmatprep.subr.bf16.mxu0 0
    %136 = vmatpush1.bf16.msra.mxu0 0
    %137 = vmatprep.subr.bf16.mxu0 0
    %138 = vmatpush1.bf16.msra.mxu0 0
    %139 = vmatprep.subr.bf16.mxu0 0
    %140 = vmatpush1.bf16.msra.mxu0 0
    %141 = vmatprep.subr.bf16.mxu0 0
    %142 = vmatpush1.bf16.msra.mxu0 0
    %143 = vmatprep.subr.bf16.mxu0 0
    %144 = vmatpush1.bf16.msra.mxu0 0
    %145 = vmatprep.subr.bf16.mxu0 0
    %146 = vmatpush1.bf16.msra.mxu0 0
    %147 = vmatprep.subr.bf16.mxu0 0
    %148 = vmatpush1.bf16.msra.mxu0 0
    %149 = vmatprep.subr.bf16.mxu0 0
    %150 = vmatpush1.bf16.msra.mxu0 0
    %151 = vmatprep.subr.bf16.mxu0 0
    %152 = vmatpush1.bf16.msra.mxu0 0
    %153 = vmatprep.subr.bf16.mxu0 0
    %154 = vmatpush1.bf16.msra.mxu0 0
    %155 = vmatprep.subr.bf16.mxu0 0
    %156 = vmatpush1.bf16.msra.mxu0 0
    %157 = vmatprep.subr.bf16.mxu0 0
    %158 = vmatpush1.bf16.msra.mxu0 0
    %159 = vmatprep.subr.bf16.mxu0 0
    %160 = vmatpush1.bf16.msra.mxu0 0
    %161 = vmatprep.subr.bf16.mxu0 0
    %162 = vmatpush1.bf16.msra.mxu0 0
    %163 = vmatprep.mubr.bf16.mxu0 0
    %164 = vmatmul.mubr.bf16.gmra.mrb[0].mxu0 %v129
    %v165 = vpop.f32.mrb[0].mxu0
    %v166 = vadd.f32 %v113, %v165
    %v167 = vpop.f32.mrb[0].mxu0
    %v168 = vpop.f32.mrb[0].mxu0
    %v169 = vpop.f32.mrb[0].mxu0
    %170 = vdwg.mxu0
    %v171 = vmax.f32 %v166, 0.0
    %v172 = vpack.c.bf16 %v171, %v171
    %v173 = vld [vmem:[#allocation7] sm:$0xf]
    %v174 = vld [vmem:[#allocation7 + $0x4] sm:$0xf]
    %v175 = vld [vmem:[#allocation7 + $0x8] sm:$0xf]
    %v176 = vld [vmem:[#allocation7 + $0xc] sm:$0xf]
    %v177 = vld [vmem:[#allocation7 + $0x10] sm:$0xf]
    %v178 = vld [vmem:[#allocation7 + $0x14] sm:$0xf]
    %v179 = vld [vmem:[#allocation7 + $0x18] sm:$0xf]
    %v180 = vld [vmem:[#allocation7 + $0x1c] sm:$0xf]
    %v181 = vld [vmem:[#allocation7 + $0x20] sm:$0xf]
    %v182 = vld [vmem:[#allocation7 + $0x24] sm:$0xf]
    %v183 = vld [vmem:[#allocation7 + $0x28] sm:$0xf]
    %v184 = vld [vmem:[#allocation7 + $0x2c] sm:$0xf]
    %v185 = vld [vmem:[#allocation7 + $0x30] sm:$0xf]
    %v186 = vld [vmem:[#allocation7 + $0x34] sm:$0xf]
    %v187 = vld [vmem:[#allocation7 + $0x38] sm:$0xf]
    %v188 = vld [vmem:[#allocation7 + $0x3c] sm:$0xf]
    %v189 = vld [vmem:[%s4] sm:$0x1]
    %v191 = vlaneseq
    %v192 = vshrl.u32 %v191, 7
    %v193 = vsub.s32 0, %v192
    %v194 = vrot.slane %v189, %v193
    %v212 = vunpack.c.l.b16 %v173
    %v213 = vunpack.c.l.b16 %v174
    %v214 = vunpack.c.l.b16 %v175
    %v215 = vunpack.c.l.b16 %v176
    %v216 = vunpack.c.l.b16 %v177
    %v217 = vunpack.c.l.b16 %v178
    %v218 = vunpack.c.l.b16 %v179
    %v219 = vunpack.c.l.b16 %v180
    %v220 = vunpack.c.l.b16 %v181
    %v221 = vunpack.c.l.b16 %v182
    %v222 = vunpack.c.l.b16 %v183
    %v223 = vunpack.c.l.b16 %v184
    %v224 = vunpack.c.l.b16 %v185
    %v225 = vunpack.c.l.b16 %v186
    %v226 = vunpack.c.l.b16 %v187
    %v227 = vunpack.c.l.b16 %v188
    %v228 = vpack.c.b16 %v213, %v212
    %v229 = vpack.c.b16 %v215, %v214
    %v230 = vpack.c.b16 %v217, %v216
    %v231 = vpack.c.b16 %v219, %v218
    %v232 = vpack.c.b16 %v221, %v220
    %v233 = vpack.c.b16 %v223, %v222
    %v234 = vpack.c.b16 %v225, %v224
    %v235 = vpack.c.b16 %v227, %v226
    %244 = vmatprep.subr.bf16.mxu0 0
    %245 = vmatpush1.bf16.msra.mxu0 %v228
    %246 = vmatprep.subr.bf16.mxu0 0
    %247 = vmatpush1.bf16.msra.mxu0 %v229
    %248 = vmatprep.subr.bf16.mxu0 0
    %249 = vmatpush1.bf16.msra.mxu0 %v230
    %250 = vmatprep.subr.bf16.mxu0 0
    %251 = vmatpush1.bf16.msra.mxu0 %v231
    %252 = vmatprep.subr.bf16.mxu0 0
    %253 = vmatpush1.bf16.msra.mxu0 %v232
    %254 = vmatprep.subr.bf16.mxu0 0
    %255 = vmatpush1.bf16.msra.mxu0 %v233
    %256 = vmatprep.subr.bf16.mxu0 0
    %257 = vmatpush1.bf16.msra.mxu0 %v234
    %258 = vmatprep.subr.bf16.mxu0 0
    %259 = vmatpush1.bf16.msra.mxu0 %v235
    %260 = vmatprep.subr.bf16.mxu0 0
    %261 = vmatpush1.bf16.msra.mxu0 0
    %262 = vmatprep.subr.bf16.mxu0 0
    %263 = vmatpush1.bf16.msra.mxu0 0
    %264 = vmatprep.subr.bf16.mxu0 0
    %265 = vmatpush1.bf16.msra.mxu0 0
    %266 = vmatprep.subr.bf16.mxu0 0
    %267 = vmatpush1.bf16.msra.mxu0 0
    %268 = vmatprep.subr.bf16.mxu0 0
    %269 = vmatpush1.bf16.msra.mxu0 0
    %270 = vmatprep.subr.bf16.mxu0 0
    %271 = vmatpush1.bf16.msra.mxu0 0
    %272 = vmatprep.subr.bf16.mxu0 0
    %273 = vmatpush1.bf16.msra.mxu0 0
    %274 = vmatprep.subr.bf16.mxu0 0
    %275 = vmatpush1.bf16.msra.mxu0 0
    %276 = vmatprep.mubr.bf16.mxu0 0
    %277 = vmatmul.mubr.bf16.gmra.mrb[0].mxu0 %v172
    %v278 = vpop.f32.mrb[0].mxu0
    %v279 = vadd.f32 %v194, %v278
    %v280 = vpop.f32.mrb[0].mxu0
    %v281 = vpop.f32.mrb[0].mxu0
    %v282 = vpop.f32.mrb[0].mxu0
    %283 = vdwg.mxu0
    %v284 = vmax.f32 %v279, 0.0
    %v285 = vpack.c.bf16 %v284, %v284
    %v286 = vld [vmem:[#allocation8] sm:$0xf]
    %v287 = vld [vmem:[#allocation8 + $0x4] sm:$0xf]
    %v288 = vld [vmem:[#allocation8 + $0x8] sm:$0xf]
    %v289 = vld [vmem:[#allocation8 + $0xc] sm:$0xf]
    %v290 = vld [vmem:[#allocation8 + $0x10] sm:$0xf]
    %v291 = vld [vmem:[#allocation8 + $0x14] sm:$0xf]
    %v292 = vld [vmem:[#allocation8 + $0x18] sm:$0xf]
    %v293 = vld [vmem:[#allocation8 + $0x1c] sm:$0xf]
    %v294 = vld [vmem:[#allocation8 + $0x20] sm:$0xf]
    %v295 = vld [vmem:[#allocation8 + $0x24] sm:$0xf]
    %v296 = vld [vmem:[#allocation8 + $0x28] sm:$0xf]
    %v297 = vld [vmem:[#allocation8 + $0x2c] sm:$0xf]
    %v298 = vld [vmem:[#allocation8 + $0x30] sm:$0xf]
    %v299 = vld [vmem:[#allocation8 + $0x34] sm:$0xf]
    %v300 = vld [vmem:[#allocation8 + $0x38] sm:$0xf]
    %v301 = vld [vmem:[#allocation8 + $0x3c] sm:$0xf]
    %v302 = vld [vmem:[%s6] sm:$0x1]
    %v304 = vlaneseq
    %v305 = vshrl.u32 %v304, 7
    %v306 = vsub.s32 0, %v305
    %v307 = vrot.slane %v302, %v306
    %v325 = vunpack.c.l.b16 %v286
    %v326 = vunpack.c.l.b16 %v287
    %v327 = vunpack.c.l.b16 %v288
    %v328 = vunpack.c.l.b16 %v289
    %v329 = vunpack.c.l.b16 %v290
    %v330 = vunpack.c.l.b16 %v291
    %v331 = vunpack.c.l.b16 %v292
    %v332 = vunpack.c.l.b16 %v293
    %v333 = vunpack.c.l.b16 %v294
    %v334 = vunpack.c.l.b16 %v295
    %v335 = vunpack.c.l.b16 %v296
    %v336 = vunpack.c.l.b16 %v297
    %v337 = vunpack.c.l.b16 %v298
    %v338 = vunpack.c.l.b16 %v299
    %v339 = vunpack.c.l.b16 %v300
    %v340 = vunpack.c.l.b16 %v301
    %v341 = vpack.c.b16 %v326, %v325
    %v342 = vpack.c.b16 %v328, %v327
    %v343 = vpack.c.b16 %v330, %v329
    %v344 = vpack.c.b16 %v332, %v331
    %v345 = vpack.c.b16 %v334, %v333
    %v346 = vpack.c.b16 %v336, %v335
    %v347 = vpack.c.b16 %v338, %v337
    %v348 = vpack.c.b16 %v340, %v339
    %357 = vmatprep.subr.bf16.mxu0 0
    %358 = vmatpush1.bf16.msra.mxu0 %v341
    %359 = vmatprep.subr.bf16.mxu0 0
    %360 = vmatpush1.bf16.msra.mxu0 %v342
    %361 = vmatprep.subr.bf16.mxu0 0
    %362 = vmatpush1.bf16.msra.mxu0 %v343
    %363 = vmatprep.subr.bf16.mxu0 0
    %364 = vmatpush1.bf16.msra.mxu0 %v344
    %365 = vmatprep.subr.bf16.mxu0 0
    %366 = vmatpush1.bf16.msra.mxu0 %v345
    %367 = vmatprep.subr.bf16.mxu0 0
    %368 = vmatpush1.bf16.msra.mxu0 %v346
    %369 = vmatprep.subr.bf16.mxu0 0
    %370 = vmatpush1.bf16.msra.mxu0 %v347
    %371 = vmatprep.subr.bf16.mxu0 0
    %372 = vmatpush1.bf16.msra.mxu0 %v348
    %373 = vmatprep.subr.bf16.mxu0 0
    %374 = vmatpush1.bf16.msra.mxu0 0
    %375 = vmatprep.subr.bf16.mxu0 0
    %376 = vmatpush1.bf16.msra.mxu0 0
    %377 = vmatprep.subr.bf16.mxu0 0
    %378 = vmatpush1.bf16.msra.mxu0 0
    %379 = vmatprep.subr.bf16.mxu0 0
    %380 = vmatpush1.bf16.msra.mxu0 0
    %381 = vmatprep.subr.bf16.mxu0 0
    %382 = vmatpush1.bf16.msra.mxu0 0
    %383 = vmatprep.subr.bf16.mxu0 0
    %384 = vmatpush1.bf16.msra.mxu0 0
    %385 = vmatprep.subr.bf16.mxu0 0
    %386 = vmatpush1.bf16.msra.mxu0 0
    %387 = vmatprep.subr.bf16.mxu0 0
    %388 = vmatpush1.bf16.msra.mxu0 0
    %389 = vmatprep.mubr.bf16.mxu0 0
    %390 = vmatmul.mubr.bf16.gmra.mrb[0].mxu0 %v285
    %v391 = vpop.f32.mrb[0].mxu0
    %v392 = vadd.f32 %v307, %v391
    %v393 = vpop.f32.mrb[0].mxu0
    %v394 = vpop.f32.mrb[0].mxu0
    %v395 = vpop.f32.mrb[0].mxu0
    %396 = vdwg.mxu0
    %v397 = vld [vmem:[#allocation10] sm:$0xf]
    %v398 = vld [vmem:[#allocation10 + $0x4] sm:$0xf]
    %v399 = vld [vmem:[#allocation10 + $0x8] sm:$0xf]
    %v400 = vld [vmem:[#allocation10 + $0xc] sm:$0xf]
    %v401 = vld [vmem:[#allocation10 + $0x10] sm:$0xf]
    %v402 = vld [vmem:[#allocation10 + $0x14] sm:$0xf]
    %v403 = vld [vmem:[#allocation10 + $0x18] sm:$0xf]
    %v404 = vld [vmem:[#allocation10 + $0x1c] sm:$0xf]
    %v405 = vld [vmem:[#allocation10 + $0x20] sm:$0xf]
    %v406 = vld [vmem:[#allocation10 + $0x24] sm:$0xf]
    %v407 = vld [vmem:[#allocation10 + $0x28] sm:$0xf]
    %v408 = vld [vmem:[#allocation10 + $0x2c] sm:$0xf]
    %v409 = vld [vmem:[#allocation10 + $0x30] sm:$0xf]
    %v410 = vld [vmem:[#allocation10 + $0x34] sm:$0xf]
    %v411 = vld [vmem:[#allocation10 + $0x38] sm:$0xf]
    %v412 = vld [vmem:[#allocation10 + $0x3c] sm:$0xf]
    %v413 = vld [vmem:[%s8] sm:$0x1]
    %v415 = vlaneseq
    %v416 = vshrl.u32 %v415, 7
    %v417 = vsub.s32 0, %v416
    %v418 = vrot.slane %v413, %v417
    %v436 = vunpack.c.l.b16 %v397
    %v437 = vunpack.c.l.b16 %v398
    %v438 = vunpack.c.l.b16 %v399
    %v439 = vunpack.c.l.b16 %v400
    %v440 = vunpack.c.l.b16 %v401
    %v441 = vunpack.c.l.b16 %v402
    %v442 = vunpack.c.l.b16 %v403
    %v443 = vunpack.c.l.b16 %v404
    %v444 = vunpack.c.l.b16 %v405
    %v445 = vunpack.c.l.b16 %v406
    %v446 = vunpack.c.l.b16 %v407
    %v447 = vunpack.c.l.b16 %v408
    %v448 = vunpack.c.l.b16 %v409
    %v449 = vunpack.c.l.b16 %v410
    %v450 = vunpack.c.l.b16 %v411
    %v451 = vunpack.c.l.b16 %v412
    %v452 = vpack.c.b16 %v437, %v436
    %v453 = vpack.c.b16 %v439, %v438
    %v454 = vpack.c.b16 %v441, %v440
    %v455 = vpack.c.b16 %v443, %v442
    %v456 = vpack.c.b16 %v445, %v444
    %v457 = vpack.c.b16 %v447, %v446
    %v458 = vpack.c.b16 %v449, %v448
    %v459 = vpack.c.b16 %v451, %v450
    %468 = vmatprep.subr.bf16.mxu0 0
    %469 = vmatpush1.bf16.msra.mxu0 %v452
    %470 = vmatprep.subr.bf16.mxu0 0
    %471 = vmatpush1.bf16.msra.mxu0 %v453
    %472 = vmatprep.subr.bf16.mxu0 0
    %473 = vmatpush1.bf16.msra.mxu0 %v454
    %474 = vmatprep.subr.bf16.mxu0 0
    %475 = vmatpush1.bf16.msra.mxu0 %v455
    %476 = vmatprep.subr.bf16.mxu0 0
    %477 = vmatpush1.bf16.msra.mxu0 %v456
    %478 = vmatprep.subr.bf16.mxu0 0
    %479 = vmatpush1.bf16.msra.mxu0 %v457
    %480 = vmatprep.subr.bf16.mxu0 0
    %481 = vmatpush1.bf16.msra.mxu0 %v458
    %482 = vmatprep.subr.bf16.mxu0 0
    %483 = vmatpush1.bf16.msra.mxu0 %v459
    %484 = vmatprep.subr.bf16.mxu0 0
    %485 = vmatpush1.bf16.msra.mxu0 0
    %486 = vmatprep.subr.bf16.mxu0 0
    %487 = vmatpush1.bf16.msra.mxu0 0
    %488 = vmatprep.subr.bf16.mxu0 0
    %489 = vmatpush1.bf16.msra.mxu0 0
    %490 = vmatprep.subr.bf16.mxu0 0
    %491 = vmatpush1.bf16.msra.mxu0 0
    %492 = vmatprep.subr.bf16.mxu0 0
    %493 = vmatpush1.bf16.msra.mxu0 0
    %494 = vmatprep.subr.bf16.mxu0 0
    %495 = vmatpush1.bf16.msra.mxu0 0
    %496 = vmatprep.subr.bf16.mxu0 0
    %497 = vmatpush1.bf16.msra.mxu0 0
    %498 = vmatprep.subr.bf16.mxu0 0
    %499 = vmatpush1.bf16.msra.mxu0 0
    %500 = vmatprep.mubr.bf16.mxu0 0
    %501 = vmatmul.mubr.bf16.gmra.mrb[0].mxu0 %v285
    %v502 = vpop.f32.mrb[0].mxu0
    %v503 = vadd.f32 %v418, %v502
    %v504 = vpop.f32.mrb[0].mxu0
    %v505 = vpop.f32.mrb[0].mxu0
    %v506 = vpop.f32.mrb[0].mxu0
    %507 = vdwg.mxu0
    %v508 = vmul.f32 %v503, 0.5
    %v509 = vmul.f32 %v508, 1.442695
    %v510 = vpow.pop %v509
    %v511 = vmax.f32 %v510, 1e-08
    %v512 = vmin.f32 %v511, 1e+08
    %513 = vst [vmem:[#allocation11] sm:$0xff] %v392
    %514 = vst [vmem:[#allocation12] sm:$0xff] %v512
    // Predicated region
    $region58: #{tpu_custom_call.1} parent=1 // pred_check
      _
    $region59: #{tpu_custom_call.1} parent=1 // pred_check_branch
      %516 = sbr.rel (0) target = $region61
    $region60: #{tpu_custom_call.1} parent=1 // pred_region
      %s518 = ssub.s32 128, 128
      %519 = vsyncadd [#allocation4], %s518
      %s521 = sshll.u32 [#allocation11], 4
      %s522 = int_to_ptr.vmem [resolvable:$true] %s521
      %524 = dma.vmem_to_hbm [thread:$0]  %s522, 128, %s9, [#allocation4]
    $region61: #{tpu_custom_call.1} parent=1 // pred_fallthru
      _
    // Predicated region
    $region62: #{tpu_custom_call.1} parent=1 // pred_check
      _
    $region63: #{tpu_custom_call.1} parent=1 // pred_check_branch
      %526 = sbr.rel (0) target = $region65
    $region64: #{tpu_custom_call.1} parent=1 // pred_region
      %s528 = ssub.s32 128, 128
      %529 = vsyncadd [#allocation13], %s528
      %s531 = sshll.u32 [#allocation12], 4
      %s532 = int_to_ptr.vmem [resolvable:$true] %s531
      %534 = dma.vmem_to_hbm [thread:$0]  %s532, 128, %s10, [#allocation13]
    $region65: #{tpu_custom_call.1} parent=1 // pred_fallthru
      _
    // Predicated region
    $region66: #{tpu_custom_call.1} parent=1 // pred_check
      _
    $region67: #{tpu_custom_call.1} parent=1 // pred_check_branch
      %536 = sbr.rel (0) target = $region69
    $region68: #{tpu_custom_call.1} parent=1 // pred_region
      %537 = dma.done [#allocation4], 128
    $region69: #{tpu_custom_call.1} parent=1 // pred_fallthru
      _
    // Predicated region
    $region70: #{tpu_custom_call.1} parent=1 // pred_check
      _
    $region71: #{tpu_custom_call.1} parent=1 // pred_check_branch
      %539 = sbr.rel (0) target = $region73
    $region72: #{tpu_custom_call.1} parent=1 // pred_region
      %540 = dma.done [#allocation13], 128
    $region73: #{tpu_custom_call.1} parent=1 // pred_fallthru
      _
    %541 = vsyncpa [#allocation3], 1
    %542 = vsyncpa [#allocation6], 1
    %543 = vsyncpa [#allocation9], 1
    %544 = vsyncpa [#allocation4], 1
    %545 = vsyncpa [#allocation13], 1

</llo_original>
